<compile_context>
chip_gen: v7x
topology: tpu7x:2x2x1
jax: 0.10.0
libtpu: 0.0.40
codegen_flags: <defaults>
</compile_context>

<pallas_src>
import functools

import jax
import jax.numpy as jnp
from jax.experimental import pallas as pl
from jax.experimental.pallas import tpu as pltpu

_LANE = 128


def _round_up(n, m):
    return ((n + m - 1) // m) * m


def _tensorcores_per_device():
    """Best-effort count of TensorCores a single Pallas grid can shard over."""
    try:
        kind = jax.devices()[0].device_kind.lower()
    except Exception:
        return 1
    for tag in ("v4", "v5p", "7x", "tpu7", "v7"):
        if tag in kind:
            return 2
    return 1


def _vmem_capacity_bytes():
    try:
        return int(pltpu.get_tpu_info().vmem_capacity_bytes)
    except Exception:
        return 64 * 1024 * 1024  # conservative (v7x per-core VMEM)


def _estimate_vmem_bytes(batch_tile, I_p, H_p, O_p, wbytes):
    """Kernel VMEM footprint: double-buffered blocks + f32 intermediates."""
    weights = wbytes * (I_p * H_p + H_p * H_p + H_p * 2 * O_p) + 4 * (2 * H_p + 2 * O_p)
    tiles = wbytes * batch_tile * I_p + 4 * batch_tile * O_p + 4 * batch_tile * O_p
    inter = 4 * batch_tile * (2 * H_p + 2 * O_p)          # h1, h2, y (f32)
    return 2 * (weights + tiles) + inter                   # 2x = pipeline buffers


def _choose_batch_tile(B, max_batch_tile, num_tc):
    if num_tc > 1 and B >= 256:
        # Make sure the "parallel" batch axis has >= num_tc grid steps.
        return min(max_batch_tile, _round_up(pl.cdiv(B, num_tc), 128))
    if B <= max_batch_tile:
        # Single-step fast path for small batches on 1-TC chips.
        return _round_up(B, 16)
    return max_batch_tile


def _stm_kernel(x_ref, eps_ref,
                w1_ref, b1_ref,
                w2_ref, b2_ref,
                w3_ref, b3_ref,
                out_ref, *, minimum_std, o_pad):
    x = x_ref[...]                                          # bf16 (or f32)

    # Layer 1: Linear + ReLU (bf16 MXU matmul, f32 accumulation + f32 bias)
    h1 = jnp.dot(x, w1_ref[...], preferred_element_type=jnp.float32) + b1_ref[...]
    h1 = jnp.maximum(h1, 0.0)

    # Layer 2: Linear + ReLU
    h2 = jnp.dot(h1.astype(w2_ref.dtype), w2_ref[...],
                 preferred_element_type=jnp.float32) + b2_ref[...]
    h2 = jnp.maximum(h2, 0.0)

    # Layer 3: fused mu/logvar head -> one (H_p, 2*O_p) matmul, then static
    # vreg-aligned slices.
    y = jnp.dot(h2.astype(w3_ref.dtype), w3_ref[...],
                preferred_element_type=jnp.float32) + b3_ref[...]
    mu = y[:, :o_pad]
    logvar = y[:, o_pad:]

    # exp() runs on the EUP slot; the rest is f32 VPU elementwise (v5e-safe).
    std = jnp.exp(logvar) + minimum_std
    out_ref[...] = (eps_ref[...] * std + mu).astype(out_ref.dtype)


def prepare_params(params, *, compute_dtype=jnp.bfloat16):
    """One-time lane-padding, mu/logvar head fusion and dtype cast.

    Call this once at parameter-init time; `stochastic_transition_forward`
    consumes the result directly, so no per-call weight padding traffic.
    """
    I, H = params["w1"].shape
    O = params["wmu"].shape[1]
    I_p, H_p, O_p = (_round_up(d, _LANE) for d in (I, H, O))

    f32 = jnp.float32
    wdt = compute_dtype
    w1 = jnp.pad(params["w1"].astype(f32), ((0, I_p - I), (0, H_p - H))).astype(wdt)
    b1 = jnp.pad(params["b1"].astype(f32), (0, H_p - H)).reshape(1, H_p)
    w2 = jnp.pad(params["w2"].astype(f32), ((0, H_p - H), (0, H_p - H))).astype(wdt)
    b2 = jnp.pad(params["b2"].astype(f32), (0, H_p - H)).reshape(1, H_p)
    # Fused head: [mu columns | logvar columns], each zero-padded to O_p.
    wmu = jnp.pad(params["wmu"].astype(f32), ((0, H_p - H), (0, O_p - O)))
    wlv = jnp.pad(params["wlv"].astype(f32), ((0, H_p - H), (0, O_p - O)))
    w3 = jnp.concatenate([wmu, wlv], axis=1).astype(wdt)               # (H_p, 2*O_p)
    b3 = jnp.concatenate([jnp.pad(params["bmu"].astype(f32), (0, O_p - O)),
                          jnp.pad(params["blv"].astype(f32), (0, O_p - O))]
                         ).reshape(1, 2 * O_p)

    prepped = dict(w1=w1, b1=b1, w2=w2, b2=b2, w3=w3, b3=b3)
    dims = dict(input_size=I, hidden_size=H, output_size=O,
                I_p=I_p, H_p=H_p, O_p=O_p)
    return prepped, dims


def stochastic_transition_forward(x, eps, prepped, dims, *, minimum_std=0.001,
                                  max_batch_tile=256):
    """x: (B, I), eps: (B, O); prepped/dims from prepare_params().

    Returns (B, O) f32 = eps * (exp(logvar) + minimum_std) + mu.
    """
    B, I = x.shape
    O = eps.shape[1]
    assert I == dims["input_size"] and O == dims["output_size"]
    I_p, H_p, O_p = dims["I_p"], dims["H_p"], dims["O_p"]

    wdt = prepped["w1"].dtype
    wbytes = jnp.dtype(wdt).itemsize

    # ---- Batch tile selection: multi-TC split / single-step fast path, then
    # shrink until the estimated VMEM footprint fits the chip.
    num_tc = _tensorcores_per_device()
    batch_tile = _choose_batch_tile(B, max_batch_tile, num_tc)

    cap = _vmem_capacity_bytes()
    budget = int(0.9 * cap)
    while (_estimate_vmem_bytes(batch_tile, I_p, H_p, O_p, wbytes) > budget
           and batch_tile > 16):
        batch_tile = max(16, _round_up(batch_tile // 2, 16))

    B_p = _round_up(B, batch_tile)

    # ---- Only the activations are touched per call (pad + cast, cheap).
    x_p = x.astype(wdt)
    if (B_p, I_p) != (B, I):
        x_p = jnp.pad(x_p, ((0, B_p - B), (0, I_p - I)))
    eps_p = eps.astype(jnp.float32)
    if (B_p, O_p) != (B, O):
        eps_p = jnp.pad(eps_p, ((0, B_p - B), (0, O_p - O)))

    grid = (B_p // batch_tile,)

    vmem_need = _estimate_vmem_bytes(batch_tile, I_p, H_p, O_p, wbytes)
    vmem_limit = int(min(budget, max(32 * 1024 * 1024, int(1.25 * vmem_need))))

    flops = 2 * B_p * (I_p * H_p + H_p * H_p + H_p * 2 * O_p)
    bytes_accessed = int(
        x_p.size * x_p.dtype.itemsize + eps_p.size * 4 + B_p * O_p * 4
        + sum(int(v.size) * v.dtype.itemsize for v in prepped.values()))
    cost = pl.CostEstimate(flops=flops, transcendentals=B_p * O_p,
                           bytes_accessed=bytes_accessed)

    # Full-array blocks with constant index for weights/biases: the same VMEM
    # block is reused across batch grid steps (no per-step weight re-fetch).
    full = lambda shape: pl.BlockSpec(shape, lambda i: (0, 0))

    kernel = functools.partial(_stm_kernel, minimum_std=minimum_std, o_pad=O_p)

    out_p = pl.pallas_call(
        kernel,
        out_shape=jax.ShapeDtypeStruct((B_p, O_p), jnp.float32),
        grid_spec=pltpu.PrefetchScalarGridSpec(
            num_scalar_prefetch=0,
            grid=grid,
            in_specs=[
                pl.BlockSpec((batch_tile, I_p), lambda i: (i, 0)),   # x (bf16)
                pl.BlockSpec((batch_tile, O_p), lambda i: (i, 0)),   # eps (f32)
                full((I_p, H_p)), full((1, H_p)),                    # layer 1
                full((H_p, H_p)), full((1, H_p)),                    # layer 2
                full((H_p, 2 * O_p)), full((1, 2 * O_p)),            # fused head
            ],
            out_specs=pl.BlockSpec((batch_tile, O_p), lambda i: (i, 0)),
        ),
        compiler_params=pltpu.CompilerParams(
            dimension_semantics=("parallel",),
            vmem_limit_bytes=vmem_limit),
        cost_estimate=cost,
    )(x_p, eps_p, prepped["w1"], prepped["b1"], prepped["w2"], prepped["b2"],
      prepped["w3"], prepped["b3"])

    return out_p[:B, :O]


def init_params(key, input_size, hidden_size, output_size):
    """Deterministic synthetic parameters, shaped like the PyTorch module.

    PyTorch Linear weights are (out, in); build them that way, then transpose
    to (in, out) for the kernel and de-interleave the final layer
    (rows 0::2 -> mu, rows 1::2 -> logvar), which reproduces reshape(-1, O, 2).
    """
    k1, k2, k3, k4, k5, k6 = jax.random.split(key, 6)
    scale = 0.1
    W1 = scale * jax.random.normal(k1, (hidden_size, input_size), jnp.float32)
    b1 = scale * jax.random.normal(k2, (hidden_size,), jnp.float32)
    W2 = scale * jax.random.normal(k3, (hidden_size, hidden_size), jnp.float32)
    b2 = scale * jax.random.normal(k4, (hidden_size,), jnp.float32)
    W3 = scale * jax.random.normal(k5, (2 * output_size, hidden_size), jnp.float32)
    b3 = scale * jax.random.normal(k6, (2 * output_size,), jnp.float32)

    Wmu, Wlv = W3[0::2, :], W3[1::2, :]
    bmu, blv = b3[0::2], b3[1::2]

    return {
        "w1": W1.T, "b1": b1,
        "w2": W2.T, "b2": b2,
        "wmu": Wmu.T, "bmu": bmu,
        "wlv": Wlv.T, "blv": blv,
    }, (W1, b1, W2, b2, W3, b3)


def reference_forward(x, eps, raw_params, minimum_std=0.001):
    """Pure-JAX f32 reference mirroring the PyTorch forward exactly."""
    W1, b1, W2, b2, W3, b3 = raw_params
    h = jnp.maximum(x @ W1.T + b1, 0.0)
    h = jnp.maximum(h @ W2.T + b2, 0.0)
    flat = h @ W3.T + b3                      # (B, 2*O)
    O = flat.shape[1] // 2
    r = flat.reshape(-1, O, 2)
    mu, logvar = r[:, :, 0], r[:, :, 1]
    std = jnp.exp(logvar) + minimum_std
    return eps * std + mu


if __name__ == "__main__":
    INPUT_SIZE = 32
    HIDDEN_SIZE = 32
    OUTPUT_SIZE = 16
    BATCH = 16
    MIN_STD = 0.001

    key = jax.random.PRNGKey(0)
    kx, keps, kparams = jax.random.split(key, 3)

    x = jax.random.normal(kx, (BATCH, INPUT_SIZE), jnp.float32)
    # torch.randn((x.shape[0], output_size)) -> deterministic JAX equivalent,
    # passed in so the kernel result is reproducible / checkable.
    eps = jax.random.normal(keps, (BATCH, OUTPUT_SIZE), jnp.float32)

    params, raw_params = init_params(kparams, INPUT_SIZE, HIDDEN_SIZE, OUTPUT_SIZE)

    # One-time padding / fusion / bf16 cast (parameter-init time, not per call).
    prepped, dims = prepare_params(params, compute_dtype=jnp.bfloat16)

    out = stochastic_transition_forward(x, eps, prepped, dims, minimum_std=MIN_STD)
    out = jax.block_until_ready(out)

    ref = reference_forward(x, eps, raw_params, minimum_std=MIN_STD)
    assert out.shape == (BATCH, OUTPUT_SIZE)
    # bf16 matmul operands with f32 accumulation -> relaxed tolerance.
    assert jnp.allclose(out, ref, atol=2e-2, rtol=2e-2), "mismatch vs reference"

    print("KERNEL_OK")
</pallas_src>

<mosaic_0001>
module attributes {stable_mosaic.version = 11 : i64} {
  func.func @_stm_kernel(%arg0: i32, %arg1: memref<16x128xbf16, #tpu.memory_space<vmem>>, %arg2: memref<16x128xf32, #tpu.memory_space<vmem>>, %arg3: memref<128x128xbf16, #tpu.memory_space<vmem>>, %arg4: memref<1x128xf32, #tpu.memory_space<vmem>>, %arg5: memref<128x128xbf16, #tpu.memory_space<vmem>>, %arg6: memref<1x128xf32, #tpu.memory_space<vmem>>, %arg7: memref<128x256xbf16, #tpu.memory_space<vmem>>, %arg8: memref<1x256xf32, #tpu.memory_space<vmem>>, %arg9: memref<16x128xf32, #tpu.memory_space<vmem>>) attributes {dimension_semantics = [#tpu.dimension_semantics<parallel>], iteration_bounds = array<i64: 1>, scalar_prefetch = 0 : i64, scratch_operands = 0 : i64, tpu.core_type = #tpu.core_type<tc>, window_params = [{transform_indices = @transform_0, window_bounds = array<i64: 16, 128>}, {transform_indices = @transform_1, window_bounds = array<i64: 16, 128>}, {pipeline_mode = #tpu.pipeline_mode<synchronous>, transform_indices = @transform_2, window_bounds = array<i64: 128, 128>}, {pipeline_mode = #tpu.pipeline_mode<synchronous>, transform_indices = @transform_3, window_bounds = array<i64: 1, 128>}, {pipeline_mode = #tpu.pipeline_mode<synchronous>, transform_indices = @transform_4, window_bounds = array<i64: 128, 128>}, {pipeline_mode = #tpu.pipeline_mode<synchronous>, transform_indices = @transform_5, window_bounds = array<i64: 1, 128>}, {pipeline_mode = #tpu.pipeline_mode<synchronous>, transform_indices = @transform_6, window_bounds = array<i64: 128, 256>}, {pipeline_mode = #tpu.pipeline_mode<synchronous>, transform_indices = @transform_7, window_bounds = array<i64: 1, 256>}, {transform_indices = @transform_8, window_bounds = array<i64: 16, 128>}]} {
    %c0 = arith.constant 0 : index
    %c0_0 = arith.constant 0 : index
    %0 = vector.load %arg1[%c0, %c0_0] : memref<16x128xbf16, #tpu.memory_space<vmem>>, vector<16x128xbf16>
    %c0_1 = arith.constant 0 : index
    %c0_2 = arith.constant 0 : index
    %1 = vector.load %arg3[%c0_1, %c0_2] : memref<128x128xbf16, #tpu.memory_space<vmem>>, vector<128x128xbf16>
    %cst = arith.constant dense<0.000000e+00> : vector<16x128xf32>
    %2 = tpu.matmul %0, %1, %cst {dimension_numbers = #tpu.dot_dimension_numbers<[1], [0], [0], [1], [0, 0, 1, 1], [], []>} : vector<16x128xbf16>, vector<128x128xbf16>, vector<16x128xf32> -> vector<16x128xf32>
    %c0_3 = arith.constant 0 : index
    %c0_4 = arith.constant 0 : index
    %3 = vector.load %arg4[%c0_3, %c0_4] : memref<1x128xf32, #tpu.memory_space<vmem>>, vector<1x128xf32>
    %4 = vector.broadcast %3 : vector<1x128xf32> to vector<16x128xf32>
    %5 = arith.addf %2, %4 : vector<16x128xf32>
    %cst_5 = arith.constant 0.000000e+00 : f32
    %6 = vector.broadcast %cst_5 : f32 to vector<16x128xf32>
    %7 = arith.maximumf %5, %6 : vector<16x128xf32>
    %8 = arith.truncf %7 : vector<16x128xf32> to vector<16x128xbf16>
    %c0_6 = arith.constant 0 : index
    %c0_7 = arith.constant 0 : index
    %9 = vector.load %arg5[%c0_6, %c0_7] : memref<128x128xbf16, #tpu.memory_space<vmem>>, vector<128x128xbf16>
    %cst_8 = arith.constant dense<0.000000e+00> : vector<16x128xf32>
    %10 = tpu.matmul %8, %9, %cst_8 {dimension_numbers = #tpu.dot_dimension_numbers<[1], [0], [0], [1], [0, 0, 1, 1], [], []>} : vector<16x128xbf16>, vector<128x128xbf16>, vector<16x128xf32> -> vector<16x128xf32>
    %c0_9 = arith.constant 0 : index
    %c0_10 = arith.constant 0 : index
    %11 = vector.load %arg6[%c0_9, %c0_10] : memref<1x128xf32, #tpu.memory_space<vmem>>, vector<1x128xf32>
    %12 = vector.broadcast %11 : vector<1x128xf32> to vector<16x128xf32>
    %13 = arith.addf %10, %12 : vector<16x128xf32>
    %cst_11 = arith.constant 0.000000e+00 : f32
    %14 = vector.broadcast %cst_11 : f32 to vector<16x128xf32>
    %15 = arith.maximumf %13, %14 : vector<16x128xf32>
    %16 = arith.truncf %15 : vector<16x128xf32> to vector<16x128xbf16>
    %c0_12 = arith.constant 0 : index
    %c0_13 = arith.constant 0 : index
    %17 = vector.load %arg7[%c0_12, %c0_13] : memref<128x256xbf16, #tpu.memory_space<vmem>>, vector<128x256xbf16>
    %cst_14 = arith.constant dense<0.000000e+00> : vector<16x256xf32>
    %18 = tpu.matmul %16, %17, %cst_14 {dimension_numbers = #tpu.dot_dimension_numbers<[1], [0], [0], [1], [0, 0, 1, 1], [], []>} : vector<16x128xbf16>, vector<128x256xbf16>, vector<16x256xf32> -> vector<16x256xf32>
    %c0_15 = arith.constant 0 : index
    %c0_16 = arith.constant 0 : index
    %19 = vector.load %arg8[%c0_15, %c0_16] : memref<1x256xf32, #tpu.memory_space<vmem>>, vector<1x256xf32>
    %20 = vector.broadcast %19 : vector<1x256xf32> to vector<16x256xf32>
    %21 = arith.addf %18, %20 : vector<16x256xf32>
    %22 = vector.extract_strided_slice %21 {offsets = [0, 0], sizes = [16, 128], strides = [1, 1]} : vector<16x256xf32> to vector<16x128xf32>
    %23 = vector.extract_strided_slice %21 {offsets = [0, 128], sizes = [16, 128], strides = [1, 1]} : vector<16x256xf32> to vector<16x128xf32>
    %24 = math.exp %23 : vector<16x128xf32>
    %cst_17 = arith.constant 1.000000e-03 : f32
    %25 = vector.broadcast %cst_17 : f32 to vector<16x128xf32>
    %26 = arith.addf %24, %25 : vector<16x128xf32>
    %c0_18 = arith.constant 0 : index
    %c0_19 = arith.constant 0 : index
    %27 = vector.load %arg2[%c0_18, %c0_19] : memref<16x128xf32, #tpu.memory_space<vmem>>, vector<16x128xf32>
    %28 = arith.mulf %27, %26 : vector<16x128xf32>
    %29 = arith.addf %28, %22 : vector<16x128xf32>
    %c0_20 = arith.constant 0 : index
    %c0_21 = arith.constant 0 : index
    %30 = vector.load %arg9[%c0_20, %c0_21] : memref<16x128xf32, #tpu.memory_space<vmem>>, vector<16x128xf32>
    tpu.vector_store %arg9[%c0_20, %c0_21], %29 {strides = array<i32>} : memref<16x128xf32, #tpu.memory_space<vmem>>, vector<16x128xf32>,
    return
  }
  func.func @transform_0(%arg0: i32) -> (i32, i32) {
    %c0_i32 = arith.constant 0 : i32
    %c0_i32_0 = arith.constant 0 : i32
    return %arg0, %c0_i32 : i32, i32
  }
  func.func @transform_1(%arg0: i32) -> (i32, i32) {
    %c0_i32 = arith.constant 0 : i32
    %c0_i32_0 = arith.constant 0 : i32
    return %arg0, %c0_i32 : i32, i32
  }
  func.func @transform_2(%arg0: i32) -> (i32, i32) {
    %c0_i32 = arith.constant 0 : i32
    %c0_i32_0 = arith.constant 0 : i32
    %c0_i32_1 = arith.constant 0 : i32
    return %c0_i32, %c0_i32_0 : i32, i32
  }
  func.func @transform_3(%arg0: i32) -> (i32, i32) {
    %c0_i32 = arith.constant 0 : i32
    %c0_i32_0 = arith.constant 0 : i32
    %c0_i32_1 = arith.constant 0 : i32
    return %c0_i32, %c0_i32_0 : i32, i32
  }
  func.func @transform_4(%arg0: i32) -> (i32, i32) {
    %c0_i32 = arith.constant 0 : i32
    %c0_i32_0 = arith.constant 0 : i32
    %c0_i32_1 = arith.constant 0 : i32
    return %c0_i32, %c0_i32_0 : i32, i32
  }
  func.func @transform_5(%arg0: i32) -> (i32, i32) {
    %c0_i32 = arith.constant 0 : i32
    %c0_i32_0 = arith.constant 0 : i32
    %c0_i32_1 = arith.constant 0 : i32
    return %c0_i32, %c0_i32_0 : i32, i32
  }
  func.func @transform_6(%arg0: i32) -> (i32, i32) {
    %c0_i32 = arith.constant 0 : i32
    %c0_i32_0 = arith.constant 0 : i32
    %c0_i32_1 = arith.constant 0 : i32
    return %c0_i32, %c0_i32_0 : i32, i32
  }
  func.func @transform_7(%arg0: i32) -> (i32, i32) {
    %c0_i32 = arith.constant 0 : i32
    %c0_i32_0 = arith.constant 0 : i32
    %c0_i32_1 = arith.constant 0 : i32
    return %c0_i32, %c0_i32_0 : i32, i32
  }
  func.func @transform_8(%arg0: i32) -> (i32, i32) {
    %c0_i32 = arith.constant 0 : i32
    %c0_i32_0 = arith.constant 0 : i32
    return %arg0, %c0_i32 : i32, i32
  }
}

</mosaic_0001>

<llo_original>
// kernel: tpu_custom_call.1
$region0: #{tpu_custom_call.1}
  #allocation0 [shape = 'u32[]', space=smem, size = 0x4, offset = 0x4, fixed_abs, tag = 'smem constant byte address 0x4 - core index']
  #allocation1 [shape = 'u32[144,128]{1,0:T(1,128)}', space=vmem, size = 0x12000, scoped, tag = 'internal scratch']
  %s0 = inlined_call_operand.hbm [shape: bf16[16,128], index: 0, kind: input, shape index: {}]
  %s1 = inlined_call_operand.hbm [shape: f32[16,128], index: 1, kind: input, shape index: {}]
  %s2 = inlined_call_operand.hbm [shape: bf16[128,128], index: 2, kind: input, shape index: {}]
  %s3 = inlined_call_operand.vmem [shape: f32[1,128], index: 3, kind: input, shape index: {}]
  %s4 = inlined_call_operand.hbm [shape: bf16[128,128], index: 4, kind: input, shape index: {}]
  %s5 = inlined_call_operand.vmem [shape: f32[1,128], index: 5, kind: input, shape index: {}]
  %s6 = inlined_call_operand.hbm [shape: bf16[128,256], index: 6, kind: input, shape index: {}]
  %s7 = inlined_call_operand.vmem [shape: f32[1,256], index: 7, kind: input, shape index: {}]
  %s8 = inlined_call_operand.hbm [shape: f32[16,128], index: 8, kind: output, shape index: {}]
  %s9 = sld [smem:[#allocation0]]
  $region62: #{tpu_custom_call.1} parent=0
    _
  %s11 = ssub.s32 1, %s9
  %s12 = scalar_select 0, %s11, %s9
  $region1: #{tpu_custom_call.1} parent=0
    #allocation2 [shape = 'u8[4096]{0}', space=vmem, size = 0x1000, scoped, tag = 'input window, operand 0, single buffered']
    #allocation3 [shape = 's32[1]{0}', space=sflag, size = 0x4, scoped, tag = 'scoped memory for tpu_custom_call.1']
    #allocation4 [shape = 's32[1]{0}', space=sflag, size = 0x4, scoped, tag = 'scoped memory for tpu_custom_call.1']
    #allocation5 [shape = 'u8[8192]{0}', space=vmem, size = 0x2000, scoped, tag = 'input window, operand 1, single buffered']
    #allocation6 [shape = 's32[1]{0}', space=sflag, size = 0x4, scoped, tag = 'scoped memory for tpu_custom_call.1']
    #allocation7 [shape = 'u8[32768]{0}', space=vmem, size = 0x8000, scoped, tag = 'input window, operand 2, single buffered']
    #allocation8 [shape = 'u8[32768]{0}', space=vmem, size = 0x8000, scoped, tag = 'input window, operand 4, single buffered']
    #allocation9 [shape = 's32[1]{0}', space=sflag, size = 0x4, scoped, tag = 'scoped memory for tpu_custom_call.1']
    #allocation10 [shape = 'u8[65536]{0}', space=vmem, size = 0x10000, scoped, tag = 'input window, operand 6, single buffered']
    #allocation11 [shape = 'u8[8192]{0}', space=vmem, size = 0x2000, scoped, tag = 'output window, operand 0, single buffered']
    %13 = vsyncpa [#allocation3], 0
    %14 = vsyncpa [#allocation6], 0
    %15 = vsyncpa [#allocation9], 0
    %16 = vsyncpa [#allocation4], 0
    // Predicated region
    $region2: #{tpu_custom_call.1} parent=1 // pred_check
      _
    $region3: #{tpu_custom_call.1} parent=1 // pred_check_branch
      %18 = sbr.rel (0) target = $region5
    $region4: #{tpu_custom_call.1} parent=1 // pred_region
      %s20 = ssub.s32 128, 128
      %21 = vsyncadd [#allocation3], %s20
      %s22 = sshll.u32 [#allocation2], 4
      %s23 = int_to_ptr.vmem [resolvable:$true] %s22
      %28 = dma.hbm_to_vmem [thread:$0]  %s0, 128, %s23, [#allocation3], 64, 64, 4
    $region5: #{tpu_custom_call.1} parent=1 // pred_fallthru
      _
    // Predicated region
    $region6: #{tpu_custom_call.1} parent=1 // pred_check
      _
    $region7: #{tpu_custom_call.1} parent=1 // pred_check_branch
      %30 = sbr.rel (0) target = $region9
    $region8: #{tpu_custom_call.1} parent=1 // pred_region
      %s32 = ssub.s32 256, 256
      %33 = vsyncadd [#allocation6], %s32
      %s34 = sshll.u32 [#allocation5], 4
      %s35 = int_to_ptr.vmem [resolvable:$true] %s34
      %40 = dma.hbm_to_vmem [thread:$0]  %s1, 256, %s35, [#allocation6], 128, 128, 8
    $region9: #{tpu_custom_call.1} parent=1 // pred_fallthru
      _
    // Predicated region
    $region10: #{tpu_custom_call.1} parent=1 // pred_check
      _
    $region11: #{tpu_custom_call.1} parent=1 // pred_check_branch
      %42 = sbr.rel (0) target = $region13
    $region12: #{tpu_custom_call.1} parent=1 // pred_region
      %s44 = ssub.s32 1024, 1024
      %45 = vsyncadd [#allocation6], %s44
      %s46 = sshll.u32 [#allocation7], 4
      %s47 = int_to_ptr.vmem [resolvable:$true] %s46
      %52 = dma.hbm_to_vmem [thread:$0]  %s2, 1024, %s47, [#allocation6], 64, 64, 4
    $region13: #{tpu_custom_call.1} parent=1 // pred_fallthru
      _
    // Predicated region
    $region14: #{tpu_custom_call.1} parent=1 // pred_check
      _
    $region15: #{tpu_custom_call.1} parent=1 // pred_check_branch
      %54 = sbr.rel (0) target = $region17
    $region16: #{tpu_custom_call.1} parent=1 // pred_region
      _
    $region17: #{tpu_custom_call.1} parent=1 // pred_fallthru
      _
    // Predicated region
    $region18: #{tpu_custom_call.1} parent=1 // pred_check
      _
    $region19: #{tpu_custom_call.1} parent=1 // pred_check_branch
      %56 = sbr.rel (0) target = $region21
    $region20: #{tpu_custom_call.1} parent=1 // pred_region
      %s58 = ssub.s32 1024, 1024
      %59 = vsyncadd [#allocation9], %s58
      %s60 = sshll.u32 [#allocation8], 4
      %s61 = int_to_ptr.vmem [resolvable:$true] %s60
      %66 = dma.hbm_to_vmem [thread:$0]  %s4, 1024, %s61, [#allocation9], 64, 64, 4
    $region21: #{tpu_custom_call.1} parent=1 // pred_fallthru
      _
    // Predicated region
    $region22: #{tpu_custom_call.1} parent=1 // pred_check
      _
    $region23: #{tpu_custom_call.1} parent=1 // pred_check_branch
      %68 = sbr.rel (0) target = $region25
    $region24: #{tpu_custom_call.1} parent=1 // pred_region
      _
    $region25: #{tpu_custom_call.1} parent=1 // pred_fallthru
      _
    // Predicated region
    $region26: #{tpu_custom_call.1} parent=1 // pred_check
      _
    $region27: #{tpu_custom_call.1} parent=1 // pred_check_branch
      %70 = sbr.rel (0) target = $region29
    $region28: #{tpu_custom_call.1} parent=1 // pred_region
      %s72 = ssub.s32 2048, 2048
      %73 = vsyncadd [#allocation9], %s72
      %s74 = sshll.u32 [#allocation10], 4
      %s75 = int_to_ptr.vmem [resolvable:$true] %s74
      %80 = dma.hbm_to_vmem [thread:$0]  %s6, 2048, %s75, [#allocation9], 128, 128, 8
    $region29: #{tpu_custom_call.1} parent=1 // pred_fallthru
      _
    // Predicated region
    $region30: #{tpu_custom_call.1} parent=1 // pred_check
      _
    $region31: #{tpu_custom_call.1} parent=1 // pred_check_branch
      %82 = sbr.rel (0) target = $region33
    $region32: #{tpu_custom_call.1} parent=1 // pred_region
      _
    $region33: #{tpu_custom_call.1} parent=1 // pred_fallthru
      _
    // Predicated region
    $region34: #{tpu_custom_call.1} parent=1 // pred_check
      _
    $region35: #{tpu_custom_call.1} parent=1 // pred_check_branch
      %84 = sbr.rel (0) target = $region37
    $region36: #{tpu_custom_call.1} parent=1 // pred_region
      %85 = dma.done [#allocation3], 128
    $region37: #{tpu_custom_call.1} parent=1 // pred_fallthru
      _
    // Predicated region
    $region38: #{tpu_custom_call.1} parent=1 // pred_check
      _
    $region39: #{tpu_custom_call.1} parent=1 // pred_check_branch
      %87 = sbr.rel (0) target = $region41
    $region40: #{tpu_custom_call.1} parent=1 // pred_region
      %88 = dma.done [#allocation6], 256
    $region41: #{tpu_custom_call.1} parent=1 // pred_fallthru
      _
    // Predicated region
    $region42: #{tpu_custom_call.1} parent=1 // pred_check
      _
    $region43: #{tpu_custom_call.1} parent=1 // pred_check_branch
      %90 = sbr.rel (0) target = $region45
    $region44: #{tpu_custom_call.1} parent=1 // pred_region
      %91 = dma.done [#allocation6], 1024
    $region45: #{tpu_custom_call.1} parent=1 // pred_fallthru
      _
    // Predicated region
    $region46: #{tpu_custom_call.1} parent=1 // pred_check
      _
    $region47: #{tpu_custom_call.1} parent=1 // pred_check_branch
      %93 = sbr.rel (0) target = $region49
    $region48: #{tpu_custom_call.1} parent=1 // pred_region
      %94 = dma.done [#allocation9], 1024
    $region49: #{tpu_custom_call.1} parent=1 // pred_fallthru
      _
    // Predicated region
    $region50: #{tpu_custom_call.1} parent=1 // pred_check
      _
    $region51: #{tpu_custom_call.1} parent=1 // pred_check_branch
      %96 = sbr.rel (0) target = $region53
    $region52: #{tpu_custom_call.1} parent=1 // pred_region
      %97 = dma.done [#allocation9], 2048
    $region53: #{tpu_custom_call.1} parent=1 // pred_fallthru
      _
    %v99 = vld [vmem:[#allocation2] sm:$0xf]
    %v100 = vld [vmem:[#allocation2 + $0x4] sm:$0xf]
    %v101 = vld [vmem:[#allocation7] sm:$0xf]
    %v102 = vld [vmem:[#allocation7 + $0x4] sm:$0xf]
    %v103 = vld [vmem:[#allocation7 + $0x8] sm:$0xf]
    %v104 = vld [vmem:[#allocation7 + $0xc] sm:$0xf]
    %v105 = vld [vmem:[#allocation7 + $0x10] sm:$0xf]
    %v106 = vld [vmem:[#allocation7 + $0x14] sm:$0xf]
    %v107 = vld [vmem:[#allocation7 + $0x18] sm:$0xf]
    %v108 = vld [vmem:[#allocation7 + $0x1c] sm:$0xf]
    %v109 = vld [vmem:[#allocation7 + $0x20] sm:$0xf]
    %v110 = vld [vmem:[#allocation7 + $0x24] sm:$0xf]
    %v111 = vld [vmem:[#allocation7 + $0x28] sm:$0xf]
    %v112 = vld [vmem:[#allocation7 + $0x2c] sm:$0xf]
    %v113 = vld [vmem:[#allocation7 + $0x30] sm:$0xf]
    %v114 = vld [vmem:[#allocation7 + $0x34] sm:$0xf]
    %v115 = vld [vmem:[#allocation7 + $0x38] sm:$0xf]
    %v116 = vld [vmem:[#allocation7 + $0x3c] sm:$0xf]
    %v117 = vld [vmem:[%s3] sm:$0x1]
    %v119 = vlaneseq
    %v120 = vshrl.u32 %v119, 7
    %v121 = vsub.s32 0, %v120
    %v122 = vrot.slane %v117, %v121
    %v126 = vunpack.c.l.b16 %v99
    %v127 = vunpack.c.l.b16 %v100
    %v128 = vpack.c.b16 %v127, %v126
    %v146 = vunpack.c.l.b16 %v101
    %v147 = vunpack.c.l.b16 %v102
    %v148 = vunpack.c.l.b16 %v103
    %v149 = vunpack.c.l.b16 %v104
    %v150 = vunpack.c.l.b16 %v105
    %v151 = vunpack.c.l.b16 %v106
    %v152 = vunpack.c.l.b16 %v107
    %v153 = vunpack.c.l.b16 %v108
    %v154 = vunpack.c.l.b16 %v109
    %v155 = vunpack.c.l.b16 %v110
    %v156 = vunpack.c.l.b16 %v111
    %v157 = vunpack.c.l.b16 %v112
    %v158 = vunpack.c.l.b16 %v113
    %v159 = vunpack.c.l.b16 %v114
    %v160 = vunpack.c.l.b16 %v115
    %v161 = vunpack.c.l.b16 %v116
    %v162 = vpack.c.b16 %v147, %v146
    %v163 = vpack.c.b16 %v149, %v148
    %v164 = vpack.c.b16 %v151, %v150
    %v165 = vpack.c.b16 %v153, %v152
    %v166 = vpack.c.b16 %v155, %v154
    %v167 = vpack.c.b16 %v157, %v156
    %v168 = vpack.c.b16 %v159, %v158
    %v169 = vpack.c.b16 %v161, %v160
    %178 = vmatprep.subr.bf16.mxu0 0
    %179 = vmatpush1.bf16.msra.mxu0 %v162
    %180 = vmatprep.subr.bf16.mxu0 0
    %181 = vmatpush1.bf16.msra.mxu0 %v163
    %182 = vmatprep.subr.bf16.mxu0 0
    %183 = vmatpush1.bf16.msra.mxu0 %v164
    %184 = vmatprep.subr.bf16.mxu0 0
    %185 = vmatpush1.bf16.msra.mxu0 %v165
    %186 = vmatprep.subr.bf16.mxu0 0
    %187 = vmatpush1.bf16.msra.mxu0 %v166
    %188 = vmatprep.subr.bf16.mxu0 0
    %189 = vmatpush1.bf16.msra.mxu0 %v167
    %190 = vmatprep.subr.bf16.mxu0 0
    %191 = vmatpush1.bf16.msra.mxu0 %v168
    %192 = vmatprep.subr.bf16.mxu0 0
    %193 = vmatpush1.bf16.msra.mxu0 %v169
    %194 = vmatprep.subr.bf16.mxu0 0
    %195 = vmatpush1.bf16.msra.mxu0 0
    %196 = vmatprep.subr.bf16.mxu0 0
    %197 = vmatpush1.bf16.msra.mxu0 0
    %198 = vmatprep.subr.bf16.mxu0 0
    %199 = vmatpush1.bf16.msra.mxu0 0
    %200 = vmatprep.subr.bf16.mxu0 0
    %201 = vmatpush1.bf16.msra.mxu0 0
    %202 = vmatprep.subr.bf16.mxu0 0
    %203 = vmatpush1.bf16.msra.mxu0 0
    %204 = vmatprep.subr.bf16.mxu0 0
    %205 = vmatpush1.bf16.msra.mxu0 0
    %206 = vmatprep.subr.bf16.mxu0 0
    %207 = vmatpush1.bf16.msra.mxu0 0
    %208 = vmatprep.subr.bf16.mxu0 0
    %209 = vmatpush1.bf16.msra.mxu0 0
    %210 = vmatprep.mubr.bf16.mxu0 0
    %211 = vmatmul.mubr.bf16.gmra.mrb[0].mxu0 %v128
    %v212 = vpop.f32.mrb[0].mxu0
    %v213 = vadd.f32 %v122, %v212
    %v214 = vpop.f32.mrb[0].mxu0
    %v215 = vpop.f32.mrb[0].mxu0
    %v216 = vadd.f32 %v122, %v215
    %v217 = vpop.f32.mrb[0].mxu0
    %218 = vdwg.mxu0
    %v219 = vmax.f32 %v213, 0.0
    %v220 = vmax.f32 %v216, 0.0
    %v221 = vpack.c.bf16 %v220, %v219
    %v222 = vld [vmem:[#allocation8] sm:$0xf]
    %v223 = vld [vmem:[#allocation8 + $0x4] sm:$0xf]
    %v224 = vld [vmem:[#allocation8 + $0x8] sm:$0xf]
    %v225 = vld [vmem:[#allocation8 + $0xc] sm:$0xf]
    %v226 = vld [vmem:[#allocation8 + $0x10] sm:$0xf]
    %v227 = vld [vmem:[#allocation8 + $0x14] sm:$0xf]
    %v228 = vld [vmem:[#allocation8 + $0x18] sm:$0xf]
    %v229 = vld [vmem:[#allocation8 + $0x1c] sm:$0xf]
    %v230 = vld [vmem:[#allocation8 + $0x20] sm:$0xf]
    %v231 = vld [vmem:[#allocation8 + $0x24] sm:$0xf]
    %v232 = vld [vmem:[#allocation8 + $0x28] sm:$0xf]
    %v233 = vld [vmem:[#allocation8 + $0x2c] sm:$0xf]
    %v234 = vld [vmem:[#allocation8 + $0x30] sm:$0xf]
    %v235 = vld [vmem:[#allocation8 + $0x34] sm:$0xf]
    %v236 = vld [vmem:[#allocation8 + $0x38] sm:$0xf]
    %v237 = vld [vmem:[#allocation8 + $0x3c] sm:$0xf]
    %v238 = vld [vmem:[%s5] sm:$0x1]
    %v240 = vlaneseq
    %v241 = vshrl.u32 %v240, 7
    %v242 = vsub.s32 0, %v241
    %v243 = vrot.slane %v238, %v242
    %v261 = vunpack.c.l.b16 %v222
    %v262 = vunpack.c.l.b16 %v223
    %v263 = vunpack.c.l.b16 %v224
    %v264 = vunpack.c.l.b16 %v225
    %v265 = vunpack.c.l.b16 %v226
    %v266 = vunpack.c.l.b16 %v227
    %v267 = vunpack.c.l.b16 %v228
    %v268 = vunpack.c.l.b16 %v229
    %v269 = vunpack.c.l.b16 %v230
    %v270 = vunpack.c.l.b16 %v231
    %v271 = vunpack.c.l.b16 %v232
    %v272 = vunpack.c.l.b16 %v233
    %v273 = vunpack.c.l.b16 %v234
    %v274 = vunpack.c.l.b16 %v235
    %v275 = vunpack.c.l.b16 %v236
    %v276 = vunpack.c.l.b16 %v237
    %v277 = vpack.c.b16 %v262, %v261
    %v278 = vpack.c.b16 %v264, %v263
    %v279 = vpack.c.b16 %v266, %v265
    %v280 = vpack.c.b16 %v268, %v267
    %v281 = vpack.c.b16 %v270, %v269
    %v282 = vpack.c.b16 %v272, %v271
    %v283 = vpack.c.b16 %v274, %v273
    %v284 = vpack.c.b16 %v276, %v275
    %293 = vmatprep.subr.bf16.mxu0 0
    %294 = vmatpush1.bf16.msra.mxu0 %v277
    %295 = vmatprep.subr.bf16.mxu0 0
    %296 = vmatpush1.bf16.msra.mxu0 %v278
    %297 = vmatprep.subr.bf16.mxu0 0
    %298 = vmatpush1.bf16.msra.mxu0 %v279
    %299 = vmatprep.subr.bf16.mxu0 0
    %300 = vmatpush1.bf16.msra.mxu0 %v280
    %301 = vmatprep.subr.bf16.mxu0 0
    %302 = vmatpush1.bf16.msra.mxu0 %v281
    %303 = vmatprep.subr.bf16.mxu0 0
    %304 = vmatpush1.bf16.msra.mxu0 %v282
    %305 = vmatprep.subr.bf16.mxu0 0
    %306 = vmatpush1.bf16.msra.mxu0 %v283
    %307 = vmatprep.subr.bf16.mxu0 0
    %308 = vmatpush1.bf16.msra.mxu0 %v284
    %309 = vmatprep.subr.bf16.mxu0 0
    %310 = vmatpush1.bf16.msra.mxu0 0
    %311 = vmatprep.subr.bf16.mxu0 0
    %312 = vmatpush1.bf16.msra.mxu0 0
    %313 = vmatprep.subr.bf16.mxu0 0
    %314 = vmatpush1.bf16.msra.mxu0 0
    %315 = vmatprep.subr.bf16.mxu0 0
    %316 = vmatpush1.bf16.msra.mxu0 0
    %317 = vmatprep.subr.bf16.mxu0 0
    %318 = vmatpush1.bf16.msra.mxu0 0
    %319 = vmatprep.subr.bf16.mxu0 0
    %320 = vmatpush1.bf16.msra.mxu0 0
    %321 = vmatprep.subr.bf16.mxu0 0
    %322 = vmatpush1.bf16.msra.mxu0 0
    %323 = vmatprep.subr.bf16.mxu0 0
    %324 = vmatpush1.bf16.msra.mxu0 0
    %325 = vmatprep.mubr.bf16.mxu0 0
    %326 = vmatmul.mubr.bf16.gmra.mrb[0].mxu0 %v221
    %v327 = vpop.f32.mrb[0].mxu0
    %v328 = vadd.f32 %v243, %v327
    %v329 = vpop.f32.mrb[0].mxu0
    %v330 = vpop.f32.mrb[0].mxu0
    %v331 = vadd.f32 %v243, %v330
    %v332 = vpop.f32.mrb[0].mxu0
    %333 = vdwg.mxu0
    %v334 = vmax.f32 %v328, 0.0
    %v335 = vmax.f32 %v331, 0.0
    %v336 = vpack.c.bf16 %v335, %v334
    %v337 = vld [vmem:[#allocation10] sm:$0xff]
    %v338 = vld [vmem:[#allocation10 + $0x8] sm:$0xff]
    %v339 = vld [vmem:[#allocation10 + $0x10] sm:$0xff]
    %v340 = vld [vmem:[#allocation10 + $0x18] sm:$0xff]
    %v341 = vld [vmem:[#allocation10 + $0x20] sm:$0xff]
    %v342 = vld [vmem:[#allocation10 + $0x28] sm:$0xff]
    %v343 = vld [vmem:[#allocation10 + $0x30] sm:$0xff]
    %v344 = vld [vmem:[#allocation10 + $0x38] sm:$0xff]
    %v345 = vld [vmem:[#allocation10 + $0x40] sm:$0xff]
    %v346 = vld [vmem:[#allocation10 + $0x48] sm:$0xff]
    %v347 = vld [vmem:[#allocation10 + $0x50] sm:$0xff]
    %v348 = vld [vmem:[#allocation10 + $0x58] sm:$0xff]
    %v349 = vld [vmem:[#allocation10 + $0x60] sm:$0xff]
    %v350 = vld [vmem:[#allocation10 + $0x68] sm:$0xff]
    %v351 = vld [vmem:[#allocation10 + $0x70] sm:$0xff]
    %v352 = vld [vmem:[#allocation10 + $0x78] sm:$0xff]
    %v353 = vld [vmem:[%s7] sm:$0x3]
    %v355 = vlaneseq
    %v356 = vshrl.u32 %v355, 7
    %v357 = vsub.s32 0, %v356
    %v358 = vrot.slane %v353, %v357
    %v359 = vlaneseq
    %v360 = vshrl.u32 %v359, 7
    %v361 = vsub.s32 1, %v360
    %v362 = vrot.slane %v353, %v361
    %v381 = vunpack.c.l.b16 %v337
    %v382 = vunpack.c.h.b16 %v337
    %v383 = vunpack.c.l.b16 %v338
    %v384 = vunpack.c.h.b16 %v338
    %v385 = vunpack.c.l.b16 %v339
    %v386 = vunpack.c.h.b16 %v339
    %v387 = vunpack.c.l.b16 %v340
    %v388 = vunpack.c.h.b16 %v340
    %v389 = vunpack.c.l.b16 %v341
    %v390 = vunpack.c.h.b16 %v341
    %v391 = vunpack.c.l.b16 %v342
    %v392 = vunpack.c.h.b16 %v342
    %v393 = vunpack.c.l.b16 %v343
    %v394 = vunpack.c.h.b16 %v343
    %v395 = vunpack.c.l.b16 %v344
    %v396 = vunpack.c.h.b16 %v344
    %v397 = vunpack.c.l.b16 %v345
    %v398 = vunpack.c.h.b16 %v345
    %v399 = vunpack.c.l.b16 %v346
    %v400 = vunpack.c.h.b16 %v346
    %v401 = vunpack.c.l.b16 %v347
    %v402 = vunpack.c.h.b16 %v347
    %v403 = vunpack.c.l.b16 %v348
    %v404 = vunpack.c.h.b16 %v348
    %v405 = vunpack.c.l.b16 %v349
    %v406 = vunpack.c.h.b16 %v349
    %v407 = vunpack.c.l.b16 %v350
    %v408 = vunpack.c.h.b16 %v350
    %v409 = vunpack.c.l.b16 %v351
    %v410 = vunpack.c.h.b16 %v351
    %v411 = vunpack.c.l.b16 %v352
    %v412 = vunpack.c.h.b16 %v352
    %v413 = vpack.c.b16 %v383, %v381
    %v414 = vpack.c.b16 %v384, %v382
    %v415 = vpack.c.b16 %v387, %v385
    %v416 = vpack.c.b16 %v388, %v386
    %v417 = vpack.c.b16 %v391, %v389
    %v418 = vpack.c.b16 %v392, %v390
    %v419 = vpack.c.b16 %v395, %v393
    %v420 = vpack.c.b16 %v396, %v394
    %v421 = vpack.c.b16 %v399, %v397
    %v422 = vpack.c.b16 %v400, %v398
    %v423 = vpack.c.b16 %v403, %v401
    %v424 = vpack.c.b16 %v404, %v402
    %v425 = vpack.c.b16 %v407, %v405
    %v426 = vpack.c.b16 %v408, %v406
    %v427 = vpack.c.b16 %v411, %v409
    %v428 = vpack.c.b16 %v412, %v410
    %445 = vmatprep.subr.bf16.mxu0 %v414
    %446 = vmatpush1.bf16.msra.mxu0 %v413
    %447 = vmatprep.subr.bf16.mxu0 %v416
    %448 = vmatpush1.bf16.msra.mxu0 %v415
    %449 = vmatprep.subr.bf16.mxu0 %v418
    %450 = vmatpush1.bf16.msra.mxu0 %v417
    %451 = vmatprep.subr.bf16.mxu0 %v420
    %452 = vmatpush1.bf16.msra.mxu0 %v419
    %453 = vmatprep.subr.bf16.mxu0 %v422
    %454 = vmatpush1.bf16.msra.mxu0 %v421
    %455 = vmatprep.subr.bf16.mxu0 %v424
    %456 = vmatpush1.bf16.msra.mxu0 %v423
    %457 = vmatprep.subr.bf16.mxu0 %v426
    %458 = vmatpush1.bf16.msra.mxu0 %v425
    %459 = vmatprep.subr.bf16.mxu0 %v428
    %460 = vmatpush1.bf16.msra.mxu0 %v427
    %461 = vmatprep.subr.bf16.mxu0 0
    %462 = vmatpush1.bf16.msra.mxu0 0
    %463 = vmatprep.subr.bf16.mxu0 0
    %464 = vmatpush1.bf16.msra.mxu0 0
    %465 = vmatprep.subr.bf16.mxu0 0
    %466 = vmatpush1.bf16.msra.mxu0 0
    %467 = vmatprep.subr.bf16.mxu0 0
    %468 = vmatpush1.bf16.msra.mxu0 0
    %469 = vmatprep.subr.bf16.mxu0 0
    %470 = vmatpush1.bf16.msra.mxu0 0
    %471 = vmatprep.subr.bf16.mxu0 0
    %472 = vmatpush1.bf16.msra.mxu0 0
    %473 = vmatprep.subr.bf16.mxu0 0
    %474 = vmatpush1.bf16.msra.mxu0 0
    %475 = vmatprep.subr.bf16.mxu0 0
    %476 = vmatpush1.bf16.msra.mxu0 0
    %477 = vmatprep.mubr.bf16.mxu0 0
    %478 = vmatmul.mubr.bf16.gmra.mrb[0].mxu0 %v336
    %v479 = vpop.f32.mrb[0].mxu0
    %v480 = vadd.f32 %v358, %v479
    %v481 = vpop.f32.mrb[0].mxu0
    %v482 = vadd.f32 %v362, %v481
    %v483 = vpop.f32.mrb[0].mxu0
    %v484 = vadd.f32 %v358, %v483
    %v485 = vpop.f32.mrb[0].mxu0
    %v486 = vadd.f32 %v362, %v485
    %487 = vdwg.mxu0
    %v488 = vmul.f32 %v482, 1.442695
    %v489 = vpow.pop %v488
    %v490 = vmul.f32 %v486, 1.442695
    %v491 = vpow.pop %v490
    %v492 = vadd.f32 %v489, 0.001
    %v493 = vadd.f32 %v491, 0.001
    %v494 = vld [vmem:[#allocation5] sm:$0xff]
    %v495 = vld [vmem:[#allocation5 + $0x8] sm:$0xff]
    %v496 = vmul.f32 %v494, %v492
    %v497 = vmul.f32 %v495, %v493
    %v498 = vadd.f32 %v496, %v480
    %v499 = vadd.f32 %v497, %v484
    %500 = vst [vmem:[#allocation11] sm:$0xff] %v498
    %501 = vst [vmem:[#allocation11 + $0x8] sm:$0xff] %v499
    // Predicated region
    $region54: #{tpu_custom_call.1} parent=1 // pred_check
      _
    $region55: #{tpu_custom_call.1} parent=1 // pred_check_branch
      %503 = sbr.rel (0) target = $region57
    $region56: #{tpu_custom_call.1} parent=1 // pred_region
      %s505 = ssub.s32 256, 256
      %506 = vsyncadd [#allocation4], %s505
      %s507 = sshll.u32 [#allocation11], 4
      %s508 = int_to_ptr.vmem [resolvable:$true] %s507
      %513 = dma.vmem_to_hbm [thread:$0]  %s508, 256, %s8, [#allocation4], 128, 128, 8
    $region57: #{tpu_custom_call.1} parent=1 // pred_fallthru
      _
    // Predicated region
    $region58: #{tpu_custom_call.1} parent=1 // pred_check
      _
    $region59: #{tpu_custom_call.1} parent=1 // pred_check_branch
      %515 = sbr.rel (0) target = $region61
    $region60: #{tpu_custom_call.1} parent=1 // pred_region
      %516 = dma.done [#allocation4], 256
    $region61: #{tpu_custom_call.1} parent=1 // pred_fallthru
      _
    %517 = vsyncpa [#allocation3], 1
    %518 = vsyncpa [#allocation6], 1
    %519 = vsyncpa [#allocation9], 1
    %520 = vsyncpa [#allocation4], 1

</llo_original>
